<compile_context>
chip_gen: v7x
topology: tpu7x:2x2x1
jax: 0.10.0
libtpu: 0.0.40
codegen_flags: <defaults>
</compile_context>

<pallas_src>
import math

import jax
import jax.numpy as jnp
from jax.experimental import pallas as pl
from jax.experimental.pallas import tpu as pltpu

_INV_SQRT2 = 1.0 / math.sqrt(2.0)


def _round_up(a: int, b: int) -> int:
    return ((a + b - 1) // b) * b


def _mlp_kernel(x_ref, w1_ref, b1_ref, w2_ref, b2_ref, o_ref):
    # x_ref : (tm, C_in)    w1_ref : (C_in, C_mlp)   b1_ref : (1, C_mlp)
    # w2_ref: (C_mlp, C_in) b2_ref : (1, C_in)       o_ref  : (tm, C_in)

    # fc1 on the MXU: operands in native dtype, f32 accumulation.
    h = jnp.dot(x_ref[...], w1_ref[...], preferred_element_type=jnp.float32)
    h = h + b1_ref[...].astype(jnp.float32)

    # Exact GELU (erf), matching torch.nn.GELU() default: 0.5*x*(1+erf(x/sqrt(2))).
    # Kept in f32 for accuracy; runs on VPU/EUP alongside the MXU work.
    h = 0.5 * h * (1.0 + jax.lax.erf(h * _INV_SQRT2))

    # dropout: identity in eval mode (no-op)

    # fc2 on the MXU: cast the intermediate back to the weight dtype (no-op for
    # f32, enables the bf16 MXU path for bf16 weights), f32 accumulation.
    y = jnp.dot(h.astype(w2_ref.dtype), w2_ref[...],
                preferred_element_type=jnp.float32)
    y = y + b2_ref[...].astype(jnp.float32)

    # dropout: identity in eval mode (no-op)
    o_ref[...] = y.astype(o_ref.dtype)


def mlp_forward(x, w1, b1, w2, b2, *, tm=256,
                vmem_limit_bytes=48 * 1024 * 1024,
                single_buffer_weights=True):
    """x: (B, N, C_in). Returns (B, N, C_in)."""
    B, N, C_in = x.shape
    C_mlp = w1.shape[1]
    M = B * N
    x2d = x.reshape(M, C_in)

    # Effective row tile: multiple of 8 (sublane), capped by the (padded) row
    # count. Rows are padded up to a tile multiple and the pad is sliced off
    # afterwards, so any B*N works with a large tile.
    tm_eff = min(tm, _round_up(M, 8))
    M_pad = _round_up(M, tm_eff)
    if M_pad != M:
        x2d = jnp.pad(x2d, ((0, M_pad - M), (0, 0)))
    grid = (M_pad // tm_eff,)

    def _build(single_buffer):
        # Weights/biases have a constant index_map (DMA'd once, resident in
        # VMEM); single-buffering them halves their VMEM footprint.
        wkw = dict(pipeline_mode=pl.Buffered(1)) if single_buffer else {}
        return pl.pallas_call(
            _mlp_kernel,
            out_shape=jax.ShapeDtypeStruct((M_pad, C_in), x.dtype),
            grid_spec=pltpu.PrefetchScalarGridSpec(
                num_scalar_prefetch=0,
                grid=grid,
                in_specs=[
                    pl.BlockSpec((tm_eff, C_in), lambda i: (i, 0)),        # x rows
                    pl.BlockSpec((C_in, C_mlp), lambda i: (0, 0), **wkw),  # w1
                    pl.BlockSpec((1, C_mlp), lambda i: (0, 0), **wkw),     # b1
                    pl.BlockSpec((C_mlp, C_in), lambda i: (0, 0), **wkw),  # w2
                    pl.BlockSpec((1, C_in), lambda i: (0, 0), **wkw),      # b2
                ],
                out_specs=pl.BlockSpec((tm_eff, C_in), lambda i: (i, 0)),
            ),
            compiler_params=pltpu.CompilerParams(
                dimension_semantics=("parallel",),
                vmem_limit_bytes=vmem_limit_bytes,
            ),
        )

    args = (x2d, w1, b1, w2, b2)
    if single_buffer_weights:
        try:
            out2d = _build(True)(*args)
        except Exception:
            # Fallback: default (double-buffered) resident weights.
            out2d = _build(False)(*args)
    else:
        out2d = _build(False)(*args)

    if M_pad != M:
        out2d = out2d[:M]
    return out2d.reshape(B, N, C_in)


def init_params(key, in_channel, mlp_channel):
    """Deterministic init matching the module's _init_weights:
    xavier_uniform for weights, normal(std=1e-6) for biases."""
    k1, k2, k3, k4 = jax.random.split(key, 4)

    def xavier_uniform(k, fan_in, fan_out):
        limit = math.sqrt(6.0 / (fan_in + fan_out))
        # stored directly in the (in, out) layout used by the kernel (x @ W)
        return jax.random.uniform(k, (fan_in, fan_out), jnp.float32, -limit, limit)

    w1 = xavier_uniform(k1, in_channel, mlp_channel)
    b1 = (1e-6 * jax.random.normal(k2, (1, mlp_channel))).astype(jnp.float32)
    w2 = xavier_uniform(k3, mlp_channel, in_channel)
    b2 = (1e-6 * jax.random.normal(k4, (1, in_channel))).astype(jnp.float32)
    return w1, b1, w2, b2


if __name__ == "__main__":
    key = jax.random.PRNGKey(0)
    # Small but lane-dense demo shapes (C_in multiple of 128 keeps output
    # stores unmasked). M = B*N = 32 rows; the wrapper pads/tiles as needed.
    B, N, in_channel, mlp_channel = 2, 16, 128, 256

    kx, kp = jax.random.split(key)
    x = jax.random.normal(kx, (B, N, in_channel), jnp.float32)
    w1, b1, w2, b2 = init_params(kp, in_channel, mlp_channel)

    out = mlp_forward(x, w1, b1, w2, b2)
    jax.block_until_ready(out)

    # Reference check in plain JAX (same math, eval-mode dropout).
    h_ref = x.reshape(-1, in_channel) @ w1 + b1
    h_ref = 0.5 * h_ref * (1.0 + jax.lax.erf(h_ref / math.sqrt(2.0)))
    ref = (h_ref @ w2 + b2).reshape(B, N, in_channel)
    assert jnp.allclose(out, ref, atol=1e-3, rtol=1e-3), "mismatch vs reference"

    print("KERNEL_OK")
</pallas_src>

<mosaic_0001>
module attributes {stable_mosaic.version = 11 : i64} {
  func.func @_mlp_kernel(%arg0: i32, %arg1: memref<32x128xf32, #tpu.memory_space<vmem>>, %arg2: memref<128x256xf32, #tpu.memory_space<vmem>>, %arg3: memref<1x256xf32, #tpu.memory_space<vmem>>, %arg4: memref<256x128xf32, #tpu.memory_space<vmem>>, %arg5: memref<1x128xf32, #tpu.memory_space<vmem>>, %arg6: memref<32x128xf32, #tpu.memory_space<vmem>>) attributes {dimension_semantics = [#tpu.dimension_semantics<parallel>], iteration_bounds = array<i64: 1>, scalar_prefetch = 0 : i64, scratch_operands = 0 : i64, tpu.core_type = #tpu.core_type<tc>, window_params = [{transform_indices = @transform_0, window_bounds = array<i64: 32, 128>}, {pipeline_mode = #tpu.pipeline_mode<synchronous>, transform_indices = @transform_1, window_bounds = array<i64: 128, 256>}, {pipeline_mode = #tpu.pipeline_mode<synchronous>, transform_indices = @transform_2, window_bounds = array<i64: 1, 256>}, {pipeline_mode = #tpu.pipeline_mode<synchronous>, transform_indices = @transform_3, window_bounds = array<i64: 256, 128>}, {pipeline_mode = #tpu.pipeline_mode<synchronous>, transform_indices = @transform_4, window_bounds = array<i64: 1, 128>}, {transform_indices = @transform_5, window_bounds = array<i64: 32, 128>}]} {
    %c0 = arith.constant 0 : index
    %c0_0 = arith.constant 0 : index
    %0 = vector.load %arg1[%c0, %c0_0] : memref<32x128xf32, #tpu.memory_space<vmem>>, vector<32x128xf32>
    %c0_1 = arith.constant 0 : index
    %c0_2 = arith.constant 0 : index
    %1 = vector.load %arg2[%c0_1, %c0_2] : memref<128x256xf32, #tpu.memory_space<vmem>>, vector<128x256xf32>
    %cst = arith.constant dense<0.000000e+00> : vector<32x256xf32>
    %2 = tpu.matmul %0, %1, %cst {dimension_numbers = #tpu.dot_dimension_numbers<[1], [0], [0], [1], [0, 0, 1, 1], [], []>} : vector<32x128xf32>, vector<128x256xf32>, vector<32x256xf32> -> vector<32x256xf32>
    %c0_3 = arith.constant 0 : index
    %c0_4 = arith.constant 0 : index
    %3 = vector.load %arg3[%c0_3, %c0_4] : memref<1x256xf32, #tpu.memory_space<vmem>>, vector<1x256xf32>
    %4 = vector.broadcast %3 : vector<1x256xf32> to vector<32x256xf32>
    %5 = arith.addf %2, %4 : vector<32x256xf32>
    %cst_5 = arith.constant 5.000000e-01 : f32
    %6 = vector.broadcast %cst_5 : f32 to vector<32x256xf32>
    %7 = arith.mulf %6, %5 : vector<32x256xf32>
    %cst_6 = arith.constant 0.707106769 : f32
    %8 = vector.broadcast %cst_6 : f32 to vector<32x256xf32>
    %9 = arith.mulf %5, %8 : vector<32x256xf32>
    %10 = math.erf %9 : vector<32x256xf32>
    %cst_7 = arith.constant 1.000000e+00 : f32
    %11 = vector.broadcast %cst_7 : f32 to vector<32x256xf32>
    %12 = arith.addf %11, %10 : vector<32x256xf32>
    %13 = arith.mulf %7, %12 : vector<32x256xf32>
    %c0_8 = arith.constant 0 : index
    %c0_9 = arith.constant 0 : index
    %14 = vector.load %arg4[%c0_8, %c0_9] : memref<256x128xf32, #tpu.memory_space<vmem>>, vector<256x128xf32>
    %cst_10 = arith.constant dense<0.000000e+00> : vector<32x128xf32>
    %15 = tpu.matmul %13, %14, %cst_10 {dimension_numbers = #tpu.dot_dimension_numbers<[1], [0], [0], [1], [0, 0, 1, 1], [], []>} : vector<32x256xf32>, vector<256x128xf32>, vector<32x128xf32> -> vector<32x128xf32>
    %c0_11 = arith.constant 0 : index
    %c0_12 = arith.constant 0 : index
    %16 = vector.load %arg5[%c0_11, %c0_12] : memref<1x128xf32, #tpu.memory_space<vmem>>, vector<1x128xf32>
    %17 = vector.broadcast %16 : vector<1x128xf32> to vector<32x128xf32>
    %18 = arith.addf %15, %17 : vector<32x128xf32>
    %c0_13 = arith.constant 0 : index
    %c0_14 = arith.constant 0 : index
    %19 = vector.load %arg6[%c0_13, %c0_14] : memref<32x128xf32, #tpu.memory_space<vmem>>, vector<32x128xf32>
    tpu.vector_store %arg6[%c0_13, %c0_14], %18 {strides = array<i32>} : memref<32x128xf32, #tpu.memory_space<vmem>>, vector<32x128xf32>,
    return
  }
  func.func @transform_0(%arg0: i32) -> (i32, i32) {
    %c0_i32 = arith.constant 0 : i32
    %c0_i32_0 = arith.constant 0 : i32
    return %arg0, %c0_i32 : i32, i32
  }
  func.func @transform_1(%arg0: i32) -> (i32, i32) {
    %c0_i32 = arith.constant 0 : i32
    %c0_i32_0 = arith.constant 0 : i32
    %c0_i32_1 = arith.constant 0 : i32
    return %c0_i32, %c0_i32_0 : i32, i32
  }
  func.func @transform_2(%arg0: i32) -> (i32, i32) {
    %c0_i32 = arith.constant 0 : i32
    %c0_i32_0 = arith.constant 0 : i32
    %c0_i32_1 = arith.constant 0 : i32
    return %c0_i32, %c0_i32_0 : i32, i32
  }
  func.func @transform_3(%arg0: i32) -> (i32, i32) {
    %c0_i32 = arith.constant 0 : i32
    %c0_i32_0 = arith.constant 0 : i32
    %c0_i32_1 = arith.constant 0 : i32
    return %c0_i32, %c0_i32_0 : i32, i32
  }
  func.func @transform_4(%arg0: i32) -> (i32, i32) {
    %c0_i32 = arith.constant 0 : i32
    %c0_i32_0 = arith.constant 0 : i32
    %c0_i32_1 = arith.constant 0 : i32
    return %c0_i32, %c0_i32_0 : i32, i32
  }
  func.func @transform_5(%arg0: i32) -> (i32, i32) {
    %c0_i32 = arith.constant 0 : i32
    %c0_i32_0 = arith.constant 0 : i32
    return %arg0, %c0_i32 : i32, i32
  }
}

module attributes {stable_mosaic.version = 11 : i64} {
  func.func @_mlp_kernel(%arg0: i32, %arg1: memref<32x128xf32, #tpu.memory_space<vmem>>, %arg2: memref<128x256xf32, #tpu.memory_space<vmem>>, %arg3: memref<1x256xf32, #tpu.memory_space<vmem>>, %arg4: memref<256x128xf32, #tpu.memory_space<vmem>>, %arg5: memref<1x128xf32, #tpu.memory_space<vmem>>, %arg6: memref<32x128xf32, #tpu.memory_space<vmem>>) attributes {dimension_semantics = [#tpu.dimension_semantics<parallel>], iteration_bounds = array<i64: 1>, scalar_prefetch = 0 : i64, scratch_operands = 0 : i64, tpu.core_type = #tpu.core_type<tc>, window_params = [{transform_indices = @transform_0, window_bounds = array<i64: 32, 128>}, {pipeline_mode = #tpu.pipeline_mode<synchronous>, transform_indices = @transform_1, window_bounds = array<i64: 128, 256>}, {pipeline_mode = #tpu.pipeline_mode<synchronous>, transform_indices = @transform_2, window_bounds = array<i64: 1, 256>}, {pipeline_mode = #tpu.pipeline_mode<synchronous>, transform_indices = @transform_3, window_bounds = array<i64: 256, 128>}, {pipeline_mode = #tpu.pipeline_mode<synchronous>, transform_indices = @transform_4, window_bounds = array<i64: 1, 128>}, {transform_indices = @transform_5, window_bounds = array<i64: 32, 128>}]} {
    %c0 = arith.constant 0 : index
    %c0_0 = arith.constant 0 : index
    %0 = vector.load %arg1[%c0, %c0_0] : memref<32x128xf32, #tpu.memory_space<vmem>>, vector<32x128xf32>
    %c0_1 = arith.constant 0 : index
    %c0_2 = arith.constant 0 : index
    %1 = vector.load %arg2[%c0_1, %c0_2] : memref<128x256xf32, #tpu.memory_space<vmem>>, vector<128x256xf32>
    %cst = arith.constant dense<0.000000e+00> : vector<32x256xf32>
    %2 = tpu.matmul %0, %1, %cst {dimension_numbers = #tpu.dot_dimension_numbers<[1], [0], [0], [1], [0, 0, 1, 1], [], []>} : vector<32x128xf32>, vector<128x256xf32>, vector<32x256xf32> -> vector<32x256xf32>
    %c0_3 = arith.constant 0 : index
    %c0_4 = arith.constant 0 : index
    %3 = vector.load %arg3[%c0_3, %c0_4] : memref<1x256xf32, #tpu.memory_space<vmem>>, vector<1x256xf32>
    %4 = vector.broadcast %3 : vector<1x256xf32> to vector<32x256xf32>
    %5 = arith.addf %2, %4 : vector<32x256xf32>
    %cst_5 = arith.constant 5.000000e-01 : f32
    %6 = vector.broadcast %cst_5 : f32 to vector<32x256xf32>
    %7 = arith.mulf %6, %5 : vector<32x256xf32>
    %cst_6 = arith.constant 0.707106769 : f32
    %8 = vector.broadcast %cst_6 : f32 to vector<32x256xf32>
    %9 = arith.mulf %5, %8 : vector<32x256xf32>
    %10 = math.erf %9 : vector<32x256xf32>
    %cst_7 = arith.constant 1.000000e+00 : f32
    %11 = vector.broadcast %cst_7 : f32 to vector<32x256xf32>
    %12 = arith.addf %11, %10 : vector<32x256xf32>
    %13 = arith.mulf %7, %12 : vector<32x256xf32>
    %c0_8 = arith.constant 0 : index
    %c0_9 = arith.constant 0 : index
    %14 = vector.load %arg4[%c0_8, %c0_9] : memref<256x128xf32, #tpu.memory_space<vmem>>, vector<256x128xf32>
    %cst_10 = arith.constant dense<0.000000e+00> : vector<32x128xf32>
    %15 = tpu.matmul %13, %14, %cst_10 {dimension_numbers = #tpu.dot_dimension_numbers<[1], [0], [0], [1], [0, 0, 1, 1], [], []>} : vector<32x256xf32>, vector<256x128xf32>, vector<32x128xf32> -> vector<32x128xf32>
    %c0_11 = arith.constant 0 : index
    %c0_12 = arith.constant 0 : index
    %16 = vector.load %arg5[%c0_11, %c0_12] : memref<1x128xf32, #tpu.memory_space<vmem>>, vector<1x128xf32>
    %17 = vector.broadcast %16 : vector<1x128xf32> to vector<32x128xf32>
    %18 = arith.addf %15, %17 : vector<32x128xf32>
    %c0_13 = arith.constant 0 : index
    %c0_14 = arith.constant 0 : index
    %19 = vector.load %arg6[%c0_13, %c0_14] : memref<32x128xf32, #tpu.memory_space<vmem>>, vector<32x128xf32>
    tpu.vector_store %arg6[%c0_13, %c0_14], %18 {strides = array<i32>} : memref<32x128xf32, #tpu.memory_space<vmem>>, vector<32x128xf32>,
    return
  }
  func.func @transform_0(%arg0: i32) -> (i32, i32) {
    %c0_i32 = arith.constant 0 : i32
    %c0_i32_0 = arith.constant 0 : i32
    return %arg0, %c0_i32 : i32, i32
  }
  func.func @transform_1(%arg0: i32) -> (i32, i32) {
    %c0_i32 = arith.constant 0 : i32
    %c0_i32_0 = arith.constant 0 : i32
    %c0_i32_1 = arith.constant 0 : i32
    return %c0_i32, %c0_i32_0 : i32, i32
  }
  func.func @transform_2(%arg0: i32) -> (i32, i32) {
    %c0_i32 = arith.constant 0 : i32
    %c0_i32_0 = arith.constant 0 : i32
    %c0_i32_1 = arith.constant 0 : i32
    return %c0_i32, %c0_i32_0 : i32, i32
  }
  func.func @transform_3(%arg0: i32) -> (i32, i32) {
    %c0_i32 = arith.constant 0 : i32
    %c0_i32_0 = arith.constant 0 : i32
    %c0_i32_1 = arith.constant 0 : i32
    return %c0_i32, %c0_i32_0 : i32, i32
  }
  func.func @transform_4(%arg0: i32) -> (i32, i32) {
    %c0_i32 = arith.constant 0 : i32
    %c0_i32_0 = arith.constant 0 : i32
    %c0_i32_1 = arith.constant 0 : i32
    return %c0_i32, %c0_i32_0 : i32, i32
  }
  func.func @transform_5(%arg0: i32) -> (i32, i32) {
    %c0_i32 = arith.constant 0 : i32
    %c0_i32_0 = arith.constant 0 : i32
    return %arg0, %c0_i32 : i32, i32
  }
}

</mosaic_0001>

<llo_original>
// kernel: tpu_custom_call.1
$region0: #{tpu_custom_call.1}
  #allocation0 [shape = 'u32[]', space=smem, size = 0x4, offset = 0x4, fixed_abs, tag = 'smem constant byte address 0x4 - core index']
  #allocation1 [shape = 'u32[144,128]{1,0:T(1,128)}', space=vmem, size = 0x12000, scoped, tag = 'internal scratch']
  %s0 = inlined_call_operand.hbm [shape: f32[32,128], index: 0, kind: input, shape index: {}]
  %s1 = inlined_call_operand.hbm [shape: f32[128,256], index: 1, kind: input, shape index: {}]
  %s2 = inlined_call_operand.vmem [shape: f32[1,256], index: 2, kind: input, shape index: {}]
  %s3 = inlined_call_operand.hbm [shape: f32[256,128], index: 3, kind: input, shape index: {}]
  %s4 = inlined_call_operand.vmem [shape: f32[1,128], index: 4, kind: input, shape index: {}]
  %s5 = inlined_call_operand.hbm [shape: f32[32,128], index: 5, kind: output, shape index: {}]
  %s6 = sld [smem:[#allocation0]]
  $region42: #{tpu_custom_call.1} parent=0
    _
  %s8 = ssub.s32 1, %s6
  %s9 = scalar_select 0, %s8, %s6
  $region1: #{tpu_custom_call.1} parent=0
    #allocation2 [shape = 'u8[16384]{0}', space=vmem, size = 0x4000, scoped, tag = 'input window, operand 0, single buffered']
    #allocation3 [shape = 's32[1]{0}', space=sflag, size = 0x4, scoped, tag = 'scoped memory for tpu_custom_call.1']
    #allocation4 [shape = 's32[1]{0}', space=sflag, size = 0x4, scoped, tag = 'scoped memory for tpu_custom_call.1']
    #allocation5 [shape = 'u8[131072]{0}', space=vmem, size = 0x20000, scoped, tag = 'input window, operand 1, single buffered']
    #allocation6 [shape = 's32[1]{0}', space=sflag, size = 0x4, scoped, tag = 'scoped memory for tpu_custom_call.1']
    #allocation7 [shape = 'u8[131072]{0}', space=vmem, size = 0x20000, scoped, tag = 'input window, operand 3, single buffered']
    #allocation8 [shape = 'u8[16384]{0}', space=vmem, size = 0x4000, scoped, tag = 'output window, operand 0, single buffered']
    %10 = vsyncpa [#allocation3], 0
    %11 = vsyncpa [#allocation6], 0
    %12 = vsyncpa [#allocation4], 0
    // Predicated region
    $region2: #{tpu_custom_call.1} parent=1 // pred_check
      _
    $region3: #{tpu_custom_call.1} parent=1 // pred_check_branch
      %14 = sbr.rel (0) target = $region5
    $region4: #{tpu_custom_call.1} parent=1 // pred_region
      %s16 = ssub.s32 512, 512
      %17 = vsyncadd [#allocation3], %s16
      %s18 = sshll.u32 [#allocation2], 4
      %s19 = int_to_ptr.vmem [resolvable:$true] %s18
      %24 = dma.hbm_to_vmem [thread:$0]  %s0, 512, %s19, [#allocation3], 128, 128, 8
    $region5: #{tpu_custom_call.1} parent=1 // pred_fallthru
      _
    // Predicated region
    $region6: #{tpu_custom_call.1} parent=1 // pred_check
      _
    $region7: #{tpu_custom_call.1} parent=1 // pred_check_branch
      %26 = sbr.rel (0) target = $region9
    $region8: #{tpu_custom_call.1} parent=1 // pred_region
      %s28 = ssub.s32 4096, 4096
      %29 = vsyncadd [#allocation6], %s28
      %s30 = sshll.u32 [#allocation5], 4
      %s31 = int_to_ptr.vmem [resolvable:$true] %s30
      %36 = dma.hbm_to_vmem [thread:$0]  %s1, 4096, %s31, [#allocation6], 256, 256, 16
    $region9: #{tpu_custom_call.1} parent=1 // pred_fallthru
      _
    // Predicated region
    $region10: #{tpu_custom_call.1} parent=1 // pred_check
      _
    $region11: #{tpu_custom_call.1} parent=1 // pred_check_branch
      %38 = sbr.rel (0) target = $region13
    $region12: #{tpu_custom_call.1} parent=1 // pred_region
      _
    $region13: #{tpu_custom_call.1} parent=1 // pred_fallthru
      _
    // Predicated region
    $region14: #{tpu_custom_call.1} parent=1 // pred_check
      _
    $region15: #{tpu_custom_call.1} parent=1 // pred_check_branch
      %40 = sbr.rel (0) target = $region17
    $region16: #{tpu_custom_call.1} parent=1 // pred_region
      %s42 = ssub.s32 4096, 4096
      %43 = vsyncadd [#allocation6], %s42
      %s44 = sshll.u32 [#allocation7], 4
      %s45 = int_to_ptr.vmem [resolvable:$true] %s44
      %50 = dma.hbm_to_vmem [thread:$0]  %s3, 4096, %s45, [#allocation6], 128, 128, 8
    $region17: #{tpu_custom_call.1} parent=1 // pred_fallthru
      _
    // Predicated region
    $region18: #{tpu_custom_call.1} parent=1 // pred_check
      _
    $region19: #{tpu_custom_call.1} parent=1 // pred_check_branch
      %52 = sbr.rel (0) target = $region21
    $region20: #{tpu_custom_call.1} parent=1 // pred_region
      _
    $region21: #{tpu_custom_call.1} parent=1 // pred_fallthru
      _
    // Predicated region
    $region22: #{tpu_custom_call.1} parent=1 // pred_check
      _
    $region23: #{tpu_custom_call.1} parent=1 // pred_check_branch
      %54 = sbr.rel (0) target = $region25
    $region24: #{tpu_custom_call.1} parent=1 // pred_region
      %55 = dma.done [#allocation3], 512
    $region25: #{tpu_custom_call.1} parent=1 // pred_fallthru
      _
    // Predicated region
    $region26: #{tpu_custom_call.1} parent=1 // pred_check
      _
    $region27: #{tpu_custom_call.1} parent=1 // pred_check_branch
      %57 = sbr.rel (0) target = $region29
    $region28: #{tpu_custom_call.1} parent=1 // pred_region
      %58 = dma.done [#allocation6], 4096
    $region29: #{tpu_custom_call.1} parent=1 // pred_fallthru
      _
    // Predicated region
    $region30: #{tpu_custom_call.1} parent=1 // pred_check
      _
    $region31: #{tpu_custom_call.1} parent=1 // pred_check_branch
      %60 = sbr.rel (0) target = $region33
    $region32: #{tpu_custom_call.1} parent=1 // pred_region
      %61 = dma.done [#allocation6], 4096
    $region33: #{tpu_custom_call.1} parent=1 // pred_fallthru
      _
    %v62 = vld [vmem:[#allocation2] sm:$0xff]
    %v63 = vld [vmem:[#allocation2 + $0x8] sm:$0xff]
    %v64 = vld [vmem:[#allocation2 + $0x10] sm:$0xff]
    %v65 = vld [vmem:[#allocation2 + $0x18] sm:$0xff]
    %v66 = vld [vmem:[#allocation5] sm:$0xff]
    %v67 = vld [vmem:[#allocation5 + $0x8] sm:$0xff]
    %v68 = vld [vmem:[#allocation5 + $0x10] sm:$0xff]
    %v69 = vld [vmem:[#allocation5 + $0x18] sm:$0xff]
    %v70 = vld [vmem:[#allocation5 + $0x20] sm:$0xff]
    %v71 = vld [vmem:[#allocation5 + $0x28] sm:$0xff]
    %v72 = vld [vmem:[#allocation5 + $0x30] sm:$0xff]
    %v73 = vld [vmem:[#allocation5 + $0x38] sm:$0xff]
    %v74 = vld [vmem:[#allocation5 + $0x40] sm:$0xff]
    %v75 = vld [vmem:[#allocation5 + $0x48] sm:$0xff]
    %v76 = vld [vmem:[#allocation5 + $0x50] sm:$0xff]
    %v77 = vld [vmem:[#allocation5 + $0x58] sm:$0xff]
    %v78 = vld [vmem:[#allocation5 + $0x60] sm:$0xff]
    %v79 = vld [vmem:[#allocation5 + $0x68] sm:$0xff]
    %v80 = vld [vmem:[#allocation5 + $0x70] sm:$0xff]
    %v81 = vld [vmem:[#allocation5 + $0x78] sm:$0xff]
    %v82 = vld [vmem:[#allocation5 + $0x80] sm:$0xff]
    %v83 = vld [vmem:[#allocation5 + $0x88] sm:$0xff]
    %v84 = vld [vmem:[#allocation5 + $0x90] sm:$0xff]
    %v85 = vld [vmem:[#allocation5 + $0x98] sm:$0xff]
    %v86 = vld [vmem:[#allocation5 + $0xa0] sm:$0xff]
    %v87 = vld [vmem:[#allocation5 + $0xa8] sm:$0xff]
    %v88 = vld [vmem:[#allocation5 + $0xb0] sm:$0xff]
    %v89 = vld [vmem:[#allocation5 + $0xb8] sm:$0xff]
    %v90 = vld [vmem:[#allocation5 + $0xc0] sm:$0xff]
    %v91 = vld [vmem:[#allocation5 + $0xc8] sm:$0xff]
    %v92 = vld [vmem:[#allocation5 + $0xd0] sm:$0xff]
    %v93 = vld [vmem:[#allocation5 + $0xd8] sm:$0xff]
    %v94 = vld [vmem:[#allocation5 + $0xe0] sm:$0xff]
    %v95 = vld [vmem:[#allocation5 + $0xe8] sm:$0xff]
    %v96 = vld [vmem:[#allocation5 + $0xf0] sm:$0xff]
    %v97 = vld [vmem:[#allocation5 + $0xf8] sm:$0xff]
    %v98 = vld [vmem:[%s2] sm:$0x3]
    %v100 = vlaneseq
    %v101 = vshrl.u32 %v100, 7
    %v102 = vsub.s32 0, %v101
    %v103 = vrot.slane %v98, %v102
    %v104 = vlaneseq
    %v105 = vshrl.u32 %v104, 7
    %v106 = vsub.s32 1, %v105
    %v107 = vrot.slane %v98, %v106
    %110 = vmatprep.subr.mxu0 %v67
    %111 = vmatpush1.msra.mxu0 %v66
    %112 = vmatprep.subr.mxu0 %v69
    %113 = vmatpush1.msra.mxu0 %v68
    %114 = vmatprep.subr.mxu0 %v71
    %115 = vmatpush1.msra.mxu0 %v70
    %116 = vmatprep.subr.mxu0 %v73
    %117 = vmatpush1.msra.mxu0 %v72
    %118 = vmatprep.subr.mxu0 %v75
    %119 = vmatpush1.msra.mxu0 %v74
    %120 = vmatprep.subr.mxu0 %v77
    %121 = vmatpush1.msra.mxu0 %v76
    %122 = vmatprep.subr.mxu0 %v79
    %123 = vmatpush1.msra.mxu0 %v78
    %124 = vmatprep.subr.mxu0 %v81
    %125 = vmatpush1.msra.mxu0 %v80
    %126 = vmatprep.subr.mxu0 %v83
    %127 = vmatpush1.msra.mxu0 %v82
    %128 = vmatprep.subr.mxu0 %v85
    %129 = vmatpush1.msra.mxu0 %v84
    %130 = vmatprep.subr.mxu0 %v87
    %131 = vmatpush1.msra.mxu0 %v86
    %132 = vmatprep.subr.mxu0 %v89
    %133 = vmatpush1.msra.mxu0 %v88
    %134 = vmatprep.subr.mxu0 %v91
    %135 = vmatpush1.msra.mxu0 %v90
    %136 = vmatprep.subr.mxu0 %v93
    %137 = vmatpush1.msra.mxu0 %v92
    %138 = vmatprep.subr.mxu0 %v95
    %139 = vmatpush1.msra.mxu0 %v94
    %140 = vmatprep.subr.mxu0 %v97
    %141 = vmatpush1.msra.mxu0 %v96
    %142 = vmatprep.subr.mxu0 0.0
    %143 = vmatpush1.msra.mxu0 0.0
    %144 = vmatprep.subr.mxu0 0.0
    %145 = vmatpush1.msra.mxu0 0.0
    %146 = vmatprep.subr.mxu0 0.0
    %147 = vmatpush1.msra.mxu0 0.0
    %148 = vmatprep.subr.mxu0 0.0
    %149 = vmatpush1.msra.mxu0 0.0
    %150 = vmatprep.subr.mxu0 0.0
    %151 = vmatpush1.msra.mxu0 0.0
    %152 = vmatprep.subr.mxu0 0.0
    %153 = vmatpush1.msra.mxu0 0.0
    %154 = vmatprep.subr.mxu0 0.0
    %155 = vmatpush1.msra.mxu0 0.0
    %156 = vmatprep.subr.mxu0 0.0
    %157 = vmatpush1.msra.mxu0 0.0
    %158 = vmatprep.subr.mxu0 0.0
    %159 = vmatpush1.msra.mxu0 0.0
    %160 = vmatprep.subr.mxu0 0.0
    %161 = vmatpush1.msra.mxu0 0.0
    %162 = vmatprep.subr.mxu0 0.0
    %163 = vmatpush1.msra.mxu0 0.0
    %164 = vmatprep.subr.mxu0 0.0
    %165 = vmatpush1.msra.mxu0 0.0
    %166 = vmatprep.subr.mxu0 0.0
    %167 = vmatpush1.msra.mxu0 0.0
    %168 = vmatprep.subr.mxu0 0.0
    %169 = vmatpush1.msra.mxu0 0.0
    %170 = vmatprep.subr.mxu0 0.0
    %171 = vmatpush1.msra.mxu0 0.0
    %172 = vmatprep.subr.mxu0 0.0
    %173 = vmatpush1.msra.mxu0 0.0
    %174 = vmatprep.mubr.f32.mxu0 0.0
    %175 = vmatmul.mubr.f32.gmra.mrb[0].mxu0 %v62
    %v176 = vpop.f32.mrb[0].mxu0
    %v177 = vadd.f32 %v103, %v176
    %v178 = vpop.f32.mrb[0].mxu0
    %v179 = vadd.f32 %v107, %v178
    %180 = vmatprep.mubr.f32.mxu0 0.0
    %181 = vmatmul.mubr.f32.gmra.mrb[0].mxu0 %v63
    %v182 = vpop.f32.mrb[0].mxu0
    %v183 = vadd.f32 %v103, %v182
    %v184 = vpop.f32.mrb[0].mxu0
    %v185 = vadd.f32 %v107, %v184
    %186 = vmatprep.mubr.f32.mxu0 0.0
    %187 = vmatmul.mubr.f32.gmra.mrb[0].mxu0 %v64
    %v188 = vpop.f32.mrb[0].mxu0
    %v189 = vadd.f32 %v103, %v188
    %v190 = vpop.f32.mrb[0].mxu0
    %v191 = vadd.f32 %v107, %v190
    %192 = vmatprep.mubr.f32.mxu0 0.0
    %193 = vmatmul.mubr.f32.gmra.mrb[0].mxu0 %v65
    %v194 = vpop.f32.mrb[0].mxu0
    %v195 = vadd.f32 %v103, %v194
    %v196 = vpop.f32.mrb[0].mxu0
    %v197 = vadd.f32 %v107, %v196
    %198 = vdwg.mxu0
    %v199 = vmul.f32 %v177, 0.5
    %v200 = vmul.f32 %v179, 0.5
    %v201 = vmul.f32 %v183, 0.5
    %v202 = vmul.f32 %v185, 0.5
    %v203 = vmul.f32 %v189, 0.5
    %v204 = vmul.f32 %v191, 0.5
    %v205 = vmul.f32 %v195, 0.5
    %v206 = vmul.f32 %v197, 0.5
    %v207 = vmul.f32 %v177, 0.70710677
    %v208 = vmul.f32 %v179, 0.70710677
    %v209 = vmul.f32 %v183, 0.70710677
    %v210 = vmul.f32 %v185, 0.70710677
    %v211 = vmul.f32 %v189, 0.70710677
    %v212 = vmul.f32 %v191, 0.70710677
    %v213 = vmul.f32 %v195, 0.70710677
    %v214 = vmul.f32 %v197, 0.70710677
    %v215 = verf.f32.pop %v207
    %v216 = verf.f32.pop %v208
    %v217 = verf.f32.pop %v209
    %v218 = verf.f32.pop %v210
    %v219 = verf.f32.pop %v211
    %v220 = verf.f32.pop %v212
    %v221 = verf.f32.pop %v213
    %v222 = verf.f32.pop %v214
    %v223 = vadd.f32 %v215, 1.0
    %v224 = vadd.f32 %v216, 1.0
    %v225 = vadd.f32 %v217, 1.0
    %v226 = vadd.f32 %v218, 1.0
    %v227 = vadd.f32 %v219, 1.0
    %v228 = vadd.f32 %v220, 1.0
    %v229 = vadd.f32 %v221, 1.0
    %v230 = vadd.f32 %v222, 1.0
    %v231 = vmul.f32 %v199, %v223
    %v232 = vmul.f32 %v200, %v224
    %v233 = vmul.f32 %v201, %v225
    %v234 = vmul.f32 %v202, %v226
    %v235 = vmul.f32 %v203, %v227
    %v236 = vmul.f32 %v204, %v228
    %v237 = vmul.f32 %v205, %v229
    %v238 = vmul.f32 %v206, %v230
    %v239 = vld [vmem:[#allocation7] sm:$0xff]
    %v240 = vld [vmem:[#allocation7 + $0x8] sm:$0xff]
    %v241 = vld [vmem:[#allocation7 + $0x10] sm:$0xff]
    %v242 = vld [vmem:[#allocation7 + $0x18] sm:$0xff]
    %v243 = vld [vmem:[#allocation7 + $0x20] sm:$0xff]
    %v244 = vld [vmem:[#allocation7 + $0x28] sm:$0xff]
    %v245 = vld [vmem:[#allocation7 + $0x30] sm:$0xff]
    %v246 = vld [vmem:[#allocation7 + $0x38] sm:$0xff]
    %v247 = vld [vmem:[#allocation7 + $0x40] sm:$0xff]
    %v248 = vld [vmem:[#allocation7 + $0x48] sm:$0xff]
    %v249 = vld [vmem:[#allocation7 + $0x50] sm:$0xff]
    %v250 = vld [vmem:[#allocation7 + $0x58] sm:$0xff]
    %v251 = vld [vmem:[#allocation7 + $0x60] sm:$0xff]
    %v252 = vld [vmem:[#allocation7 + $0x68] sm:$0xff]
    %v253 = vld [vmem:[#allocation7 + $0x70] sm:$0xff]
    %v254 = vld [vmem:[#allocation7 + $0x78] sm:$0xff]
    %v255 = vld [vmem:[#allocation7 + $0x80] sm:$0xff]
    %v256 = vld [vmem:[#allocation7 + $0x88] sm:$0xff]
    %v257 = vld [vmem:[#allocation7 + $0x90] sm:$0xff]
    %v258 = vld [vmem:[#allocation7 + $0x98] sm:$0xff]
    %v259 = vld [vmem:[#allocation7 + $0xa0] sm:$0xff]
    %v260 = vld [vmem:[#allocation7 + $0xa8] sm:$0xff]
    %v261 = vld [vmem:[#allocation7 + $0xb0] sm:$0xff]
    %v262 = vld [vmem:[#allocation7 + $0xb8] sm:$0xff]
    %v263 = vld [vmem:[#allocation7 + $0xc0] sm:$0xff]
    %v264 = vld [vmem:[#allocation7 + $0xc8] sm:$0xff]
    %v265 = vld [vmem:[#allocation7 + $0xd0] sm:$0xff]
    %v266 = vld [vmem:[#allocation7 + $0xd8] sm:$0xff]
    %v267 = vld [vmem:[#allocation7 + $0xe0] sm:$0xff]
    %v268 = vld [vmem:[#allocation7 + $0xe8] sm:$0xff]
    %v269 = vld [vmem:[#allocation7 + $0xf0] sm:$0xff]
    %v270 = vld [vmem:[#allocation7 + $0xf8] sm:$0xff]
    %v271 = vld [vmem:[%s4] sm:$0x1]
    %v273 = vlaneseq
    %v274 = vshrl.u32 %v273, 7
    %v275 = vsub.s32 0, %v274
    %v276 = vrot.slane %v271, %v275
    %278 = vmatprep.subr.mxu0 0.0
    %279 = vmatpush1.msra.mxu0 %v239
    %280 = vmatprep.subr.mxu0 0.0
    %281 = vmatpush1.msra.mxu0 %v240
    %282 = vmatprep.subr.mxu0 0.0
    %283 = vmatpush1.msra.mxu0 %v241
    %284 = vmatprep.subr.mxu0 0.0
    %285 = vmatpush1.msra.mxu0 %v242
    %286 = vmatprep.subr.mxu0 0.0
    %287 = vmatpush1.msra.mxu0 %v243
    %288 = vmatprep.subr.mxu0 0.0
    %289 = vmatpush1.msra.mxu0 %v244
    %290 = vmatprep.subr.mxu0 0.0
    %291 = vmatpush1.msra.mxu0 %v245
    %292 = vmatprep.subr.mxu0 0.0
    %293 = vmatpush1.msra.mxu0 %v246
    %294 = vmatprep.subr.mxu0 0.0
    %295 = vmatpush1.msra.mxu0 %v247
    %296 = vmatprep.subr.mxu0 0.0
    %297 = vmatpush1.msra.mxu0 %v248
    %298 = vmatprep.subr.mxu0 0.0
    %299 = vmatpush1.msra.mxu0 %v249
    %300 = vmatprep.subr.mxu0 0.0
    %301 = vmatpush1.msra.mxu0 %v250
    %302 = vmatprep.subr.mxu0 0.0
    %303 = vmatpush1.msra.mxu0 %v251
    %304 = vmatprep.subr.mxu0 0.0
    %305 = vmatpush1.msra.mxu0 %v252
    %306 = vmatprep.subr.mxu0 0.0
    %307 = vmatpush1.msra.mxu0 %v253
    %308 = vmatprep.subr.mxu0 0.0
    %309 = vmatpush1.msra.mxu0 %v254
    %310 = vmatprep.subr.mxu0 0.0
    %311 = vmatpush1.msra.mxu0 %v255
    %312 = vmatprep.subr.mxu0 0.0
    %313 = vmatpush1.msra.mxu0 %v256
    %314 = vmatprep.subr.mxu0 0.0
    %315 = vmatpush1.msra.mxu0 %v257
    %316 = vmatprep.subr.mxu0 0.0
    %317 = vmatpush1.msra.mxu0 %v258
    %318 = vmatprep.subr.mxu0 0.0
    %319 = vmatpush1.msra.mxu0 %v259
    %320 = vmatprep.subr.mxu0 0.0
    %321 = vmatpush1.msra.mxu0 %v260
    %322 = vmatprep.subr.mxu0 0.0
    %323 = vmatpush1.msra.mxu0 %v261
    %324 = vmatprep.subr.mxu0 0.0
    %325 = vmatpush1.msra.mxu0 %v262
    %326 = vmatprep.subr.mxu0 0.0
    %327 = vmatpush1.msra.mxu0 %v263
    %328 = vmatprep.subr.mxu0 0.0
    %329 = vmatpush1.msra.mxu0 %v264
    %330 = vmatprep.subr.mxu0 0.0
    %331 = vmatpush1.msra.mxu0 %v265
    %332 = vmatprep.subr.mxu0 0.0
    %333 = vmatpush1.msra.mxu0 %v266
    %334 = vmatprep.subr.mxu0 0.0
    %335 = vmatpush1.msra.mxu0 %v267
    %336 = vmatprep.subr.mxu0 0.0
    %337 = vmatpush1.msra.mxu0 %v268
    %338 = vmatprep.subr.mxu0 0.0
    %339 = vmatpush1.msra.mxu0 %v269
    %340 = vmatprep.subr.mxu0 0.0
    %341 = vmatpush1.msra.mxu0 %v270
    %342 = vmatprep.mubr.f32.mxu0 %v232
    %343 = vmatmul.mubr.f32.gmra.mrb[0].mxu0 %v231
    %v344 = vpop.f32.mrb[0].mxu0
    %v345 = vadd.f32 %v276, %v344
    %v346 = vpop.f32.mrb[0].mxu0
    %347 = vmatprep.mubr.f32.mxu0 %v234
    %348 = vmatmul.mubr.f32.gmra.mrb[0].mxu0 %v233
    %v349 = vpop.f32.mrb[0].mxu0
    %v350 = vadd.f32 %v276, %v349
    %v351 = vpop.f32.mrb[0].mxu0
    %352 = vmatprep.mubr.f32.mxu0 %v236
    %353 = vmatmul.mubr.f32.gmra.mrb[0].mxu0 %v235
    %v354 = vpop.f32.mrb[0].mxu0
    %v355 = vadd.f32 %v276, %v354
    %v356 = vpop.f32.mrb[0].mxu0
    %357 = vmatprep.mubr.f32.mxu0 %v238
    %358 = vmatmul.mubr.f32.gmra.mrb[0].mxu0 %v237
    %v359 = vpop.f32.mrb[0].mxu0
    %v360 = vadd.f32 %v276, %v359
    %v361 = vpop.f32.mrb[0].mxu0
    %362 = vdwg.mxu0
    %363 = vst [vmem:[#allocation8] sm:$0xff] %v345
    %364 = vst [vmem:[#allocation8 + $0x8] sm:$0xff] %v350
    %365 = vst [vmem:[#allocation8 + $0x10] sm:$0xff] %v355
    %366 = vst [vmem:[#allocation8 + $0x18] sm:$0xff] %v360
    // Predicated region
    $region34: #{tpu_custom_call.1} parent=1 // pred_check
      _
    $region35: #{tpu_custom_call.1} parent=1 // pred_check_branch
      %368 = sbr.rel (0) target = $region37
    $region36: #{tpu_custom_call.1} parent=1 // pred_region
      %s370 = ssub.s32 512, 512
      %371 = vsyncadd [#allocation4], %s370
      %s372 = sshll.u32 [#allocation8], 4
      %s373 = int_to_ptr.vmem [resolvable:$true] %s372
      %378 = dma.vmem_to_hbm [thread:$0]  %s373, 512, %s5, [#allocation4], 128, 128, 8
    $region37: #{tpu_custom_call.1} parent=1 // pred_fallthru
      _
    // Predicated region
    $region38: #{tpu_custom_call.1} parent=1 // pred_check
      _
    $region39: #{tpu_custom_call.1} parent=1 // pred_check_branch
      %380 = sbr.rel (0) target = $region41
    $region40: #{tpu_custom_call.1} parent=1 // pred_region
      %381 = dma.done [#allocation4], 512
    $region41: #{tpu_custom_call.1} parent=1 // pred_fallthru
      _
    %382 = vsyncpa [#allocation3], 1
    %383 = vsyncpa [#allocation6], 1
    %384 = vsyncpa [#allocation4], 1

// kernel: tpu_custom_call.1
$region0: #{tpu_custom_call.1}
  #allocation0 [shape = 'u32[]', space=smem, size = 0x4, offset = 0x4, fixed_abs, tag = 'smem constant byte address 0x4 - core index']
  #allocation1 [shape = 'u32[144,128]{1,0:T(1,128)}', space=vmem, size = 0x12000, scoped, tag = 'internal scratch']
  %s0 = inlined_call_operand.hbm [shape: f32[32,128], index: 0, kind: input, shape index: {}]
  %s1 = inlined_call_operand.hbm [shape: f32[128,256], index: 1, kind: input, shape index: {}]
  %s2 = inlined_call_operand.vmem [shape: f32[1,256], index: 2, kind: input, shape index: {}]
  %s3 = inlined_call_operand.hbm [shape: f32[256,128], index: 3, kind: input, shape index: {}]
  %s4 = inlined_call_operand.vmem [shape: f32[1,128], index: 4, kind: input, shape index: {}]
  %s5 = inlined_call_operand.hbm [shape: f32[32,128], index: 5, kind: output, shape index: {}]
  %s6 = sld [smem:[#allocation0]]
  $region42: #{tpu_custom_call.1} parent=0
    _
  %s8 = ssub.s32 1, %s6
  %s9 = scalar_select 0, %s8, %s6
  $region1: #{tpu_custom_call.1} parent=0
    #allocation2 [shape = 'u8[16384]{0}', space=vmem, size = 0x4000, scoped, tag = 'input window, operand 0, single buffered']
    #allocation3 [shape = 's32[1]{0}', space=sflag, size = 0x4, scoped, tag = 'scoped memory for tpu_custom_call.1']
    #allocation4 [shape = 's32[1]{0}', space=sflag, size = 0x4, scoped, tag = 'scoped memory for tpu_custom_call.1']
    #allocation5 [shape = 'u8[131072]{0}', space=vmem, size = 0x20000, scoped, tag = 'input window, operand 1, single buffered']
    #allocation6 [shape = 's32[1]{0}', space=sflag, size = 0x4, scoped, tag = 'scoped memory for tpu_custom_call.1']
    #allocation7 [shape = 'u8[131072]{0}', space=vmem, size = 0x20000, scoped, tag = 'input window, operand 3, single buffered']
    #allocation8 [shape = 'u8[16384]{0}', space=vmem, size = 0x4000, scoped, tag = 'output window, operand 0, single buffered']
    %10 = vsyncpa [#allocation3], 0
    %11 = vsyncpa [#allocation6], 0
    %12 = vsyncpa [#allocation4], 0
    // Predicated region
    $region2: #{tpu_custom_call.1} parent=1 // pred_check
      _
    $region3: #{tpu_custom_call.1} parent=1 // pred_check_branch
      %14 = sbr.rel (0) target = $region5
    $region4: #{tpu_custom_call.1} parent=1 // pred_region
      %s16 = ssub.s32 512, 512
      %17 = vsyncadd [#allocation3], %s16
      %s18 = sshll.u32 [#allocation2], 4
      %s19 = int_to_ptr.vmem [resolvable:$true] %s18
      %24 = dma.hbm_to_vmem [thread:$0]  %s0, 512, %s19, [#allocation3], 128, 128, 8
    $region5: #{tpu_custom_call.1} parent=1 // pred_fallthru
      _
    // Predicated region
    $region6: #{tpu_custom_call.1} parent=1 // pred_check
      _
    $region7: #{tpu_custom_call.1} parent=1 // pred_check_branch
      %26 = sbr.rel (0) target = $region9
    $region8: #{tpu_custom_call.1} parent=1 // pred_region
      %s28 = ssub.s32 4096, 4096
      %29 = vsyncadd [#allocation6], %s28
      %s30 = sshll.u32 [#allocation5], 4
      %s31 = int_to_ptr.vmem [resolvable:$true] %s30
      %36 = dma.hbm_to_vmem [thread:$0]  %s1, 4096, %s31, [#allocation6], 256, 256, 16
    $region9: #{tpu_custom_call.1} parent=1 // pred_fallthru
      _
    // Predicated region
    $region10: #{tpu_custom_call.1} parent=1 // pred_check
      _
    $region11: #{tpu_custom_call.1} parent=1 // pred_check_branch
      %38 = sbr.rel (0) target = $region13
    $region12: #{tpu_custom_call.1} parent=1 // pred_region
      _
    $region13: #{tpu_custom_call.1} parent=1 // pred_fallthru
      _
    // Predicated region
    $region14: #{tpu_custom_call.1} parent=1 // pred_check
      _
    $region15: #{tpu_custom_call.1} parent=1 // pred_check_branch
      %40 = sbr.rel (0) target = $region17
    $region16: #{tpu_custom_call.1} parent=1 // pred_region
      %s42 = ssub.s32 4096, 4096
      %43 = vsyncadd [#allocation6], %s42
      %s44 = sshll.u32 [#allocation7], 4
      %s45 = int_to_ptr.vmem [resolvable:$true] %s44
      %50 = dma.hbm_to_vmem [thread:$0]  %s3, 4096, %s45, [#allocation6], 128, 128, 8
    $region17: #{tpu_custom_call.1} parent=1 // pred_fallthru
      _
    // Predicated region
    $region18: #{tpu_custom_call.1} parent=1 // pred_check
      _
    $region19: #{tpu_custom_call.1} parent=1 // pred_check_branch
      %52 = sbr.rel (0) target = $region21
    $region20: #{tpu_custom_call.1} parent=1 // pred_region
      _
    $region21: #{tpu_custom_call.1} parent=1 // pred_fallthru
      _
    // Predicated region
    $region22: #{tpu_custom_call.1} parent=1 // pred_check
      _
    $region23: #{tpu_custom_call.1} parent=1 // pred_check_branch
      %54 = sbr.rel (0) target = $region25
    $region24: #{tpu_custom_call.1} parent=1 // pred_region
      %55 = dma.done [#allocation3], 512
    $region25: #{tpu_custom_call.1} parent=1 // pred_fallthru
      _
    // Predicated region
    $region26: #{tpu_custom_call.1} parent=1 // pred_check
      _
    $region27: #{tpu_custom_call.1} parent=1 // pred_check_branch
      %57 = sbr.rel (0) target = $region29
    $region28: #{tpu_custom_call.1} parent=1 // pred_region
      %58 = dma.done [#allocation6], 4096
    $region29: #{tpu_custom_call.1} parent=1 // pred_fallthru
      _
    // Predicated region
    $region30: #{tpu_custom_call.1} parent=1 // pred_check
      _
    $region31: #{tpu_custom_call.1} parent=1 // pred_check_branch
      %60 = sbr.rel (0) target = $region33
    $region32: #{tpu_custom_call.1} parent=1 // pred_region
      %61 = dma.done [#allocation6], 4096
    $region33: #{tpu_custom_call.1} parent=1 // pred_fallthru
      _
    %v62 = vld [vmem:[#allocation2] sm:$0xff]
    %v63 = vld [vmem:[#allocation2 + $0x8] sm:$0xff]
    %v64 = vld [vmem:[#allocation2 + $0x10] sm:$0xff]
    %v65 = vld [vmem:[#allocation2 + $0x18] sm:$0xff]
    %v66 = vld [vmem:[#allocation5] sm:$0xff]
    %v67 = vld [vmem:[#allocation5 + $0x8] sm:$0xff]
    %v68 = vld [vmem:[#allocation5 + $0x10] sm:$0xff]
    %v69 = vld [vmem:[#allocation5 + $0x18] sm:$0xff]
    %v70 = vld [vmem:[#allocation5 + $0x20] sm:$0xff]
    %v71 = vld [vmem:[#allocation5 + $0x28] sm:$0xff]
    %v72 = vld [vmem:[#allocation5 + $0x30] sm:$0xff]
    %v73 = vld [vmem:[#allocation5 + $0x38] sm:$0xff]
    %v74 = vld [vmem:[#allocation5 + $0x40] sm:$0xff]
    %v75 = vld [vmem:[#allocation5 + $0x48] sm:$0xff]
    %v76 = vld [vmem:[#allocation5 + $0x50] sm:$0xff]
    %v77 = vld [vmem:[#allocation5 + $0x58] sm:$0xff]
    %v78 = vld [vmem:[#allocation5 + $0x60] sm:$0xff]
    %v79 = vld [vmem:[#allocation5 + $0x68] sm:$0xff]
    %v80 = vld [vmem:[#allocation5 + $0x70] sm:$0xff]
    %v81 = vld [vmem:[#allocation5 + $0x78] sm:$0xff]
    %v82 = vld [vmem:[#allocation5 + $0x80] sm:$0xff]
    %v83 = vld [vmem:[#allocation5 + $0x88] sm:$0xff]
    %v84 = vld [vmem:[#allocation5 + $0x90] sm:$0xff]
    %v85 = vld [vmem:[#allocation5 + $0x98] sm:$0xff]
    %v86 = vld [vmem:[#allocation5 + $0xa0] sm:$0xff]
    %v87 = vld [vmem:[#allocation5 + $0xa8] sm:$0xff]
    %v88 = vld [vmem:[#allocation5 + $0xb0] sm:$0xff]
    %v89 = vld [vmem:[#allocation5 + $0xb8] sm:$0xff]
    %v90 = vld [vmem:[#allocation5 + $0xc0] sm:$0xff]
    %v91 = vld [vmem:[#allocation5 + $0xc8] sm:$0xff]
    %v92 = vld [vmem:[#allocation5 + $0xd0] sm:$0xff]
    %v93 = vld [vmem:[#allocation5 + $0xd8] sm:$0xff]
    %v94 = vld [vmem:[#allocation5 + $0xe0] sm:$0xff]
    %v95 = vld [vmem:[#allocation5 + $0xe8] sm:$0xff]
    %v96 = vld [vmem:[#allocation5 + $0xf0] sm:$0xff]
    %v97 = vld [vmem:[#allocation5 + $0xf8] sm:$0xff]
    %v98 = vld [vmem:[%s2] sm:$0x3]
    %v100 = vlaneseq
    %v101 = vshrl.u32 %v100, 7
    %v102 = vsub.s32 0, %v101
    %v103 = vrot.slane %v98, %v102
    %v104 = vlaneseq
    %v105 = vshrl.u32 %v104, 7
    %v106 = vsub.s32 1, %v105
    %v107 = vrot.slane %v98, %v106
    %110 = vmatprep.subr.mxu0 %v67
    %111 = vmatpush1.msra.mxu0 %v66
    %112 = vmatprep.subr.mxu0 %v69
    %113 = vmatpush1.msra.mxu0 %v68
    %114 = vmatprep.subr.mxu0 %v71
    %115 = vmatpush1.msra.mxu0 %v70
    %116 = vmatprep.subr.mxu0 %v73
    %117 = vmatpush1.msra.mxu0 %v72
    %118 = vmatprep.subr.mxu0 %v75
    %119 = vmatpush1.msra.mxu0 %v74
    %120 = vmatprep.subr.mxu0 %v77
    %121 = vmatpush1.msra.mxu0 %v76
    %122 = vmatprep.subr.mxu0 %v79
    %123 = vmatpush1.msra.mxu0 %v78
    %124 = vmatprep.subr.mxu0 %v81
    %125 = vmatpush1.msra.mxu0 %v80
    %126 = vmatprep.subr.mxu0 %v83
    %127 = vmatpush1.msra.mxu0 %v82
    %128 = vmatprep.subr.mxu0 %v85
    %129 = vmatpush1.msra.mxu0 %v84
    %130 = vmatprep.subr.mxu0 %v87
    %131 = vmatpush1.msra.mxu0 %v86
    %132 = vmatprep.subr.mxu0 %v89
    %133 = vmatpush1.msra.mxu0 %v88
    %134 = vmatprep.subr.mxu0 %v91
    %135 = vmatpush1.msra.mxu0 %v90
    %136 = vmatprep.subr.mxu0 %v93
    %137 = vmatpush1.msra.mxu0 %v92
    %138 = vmatprep.subr.mxu0 %v95
    %139 = vmatpush1.msra.mxu0 %v94
    %140 = vmatprep.subr.mxu0 %v97
    %141 = vmatpush1.msra.mxu0 %v96
    %142 = vmatprep.subr.mxu0 0.0
    %143 = vmatpush1.msra.mxu0 0.0
    %144 = vmatprep.subr.mxu0 0.0
    %145 = vmatpush1.msra.mxu0 0.0
    %146 = vmatprep.subr.mxu0 0.0
    %147 = vmatpush1.msra.mxu0 0.0
    %148 = vmatprep.subr.mxu0 0.0
    %149 = vmatpush1.msra.mxu0 0.0
    %150 = vmatprep.subr.mxu0 0.0
    %151 = vmatpush1.msra.mxu0 0.0
    %152 = vmatprep.subr.mxu0 0.0
    %153 = vmatpush1.msra.mxu0 0.0
    %154 = vmatprep.subr.mxu0 0.0
    %155 = vmatpush1.msra.mxu0 0.0
    %156 = vmatprep.subr.mxu0 0.0
    %157 = vmatpush1.msra.mxu0 0.0
    %158 = vmatprep.subr.mxu0 0.0
    %159 = vmatpush1.msra.mxu0 0.0
    %160 = vmatprep.subr.mxu0 0.0
    %161 = vmatpush1.msra.mxu0 0.0
    %162 = vmatprep.subr.mxu0 0.0
    %163 = vmatpush1.msra.mxu0 0.0
    %164 = vmatprep.subr.mxu0 0.0
    %165 = vmatpush1.msra.mxu0 0.0
    %166 = vmatprep.subr.mxu0 0.0
    %167 = vmatpush1.msra.mxu0 0.0
    %168 = vmatprep.subr.mxu0 0.0
    %169 = vmatpush1.msra.mxu0 0.0
    %170 = vmatprep.subr.mxu0 0.0
    %171 = vmatpush1.msra.mxu0 0.0
    %172 = vmatprep.subr.mxu0 0.0
    %173 = vmatpush1.msra.mxu0 0.0
    %174 = vmatprep.mubr.f32.mxu0 0.0
    %175 = vmatmul.mubr.f32.gmra.mrb[0].mxu0 %v62
    %v176 = vpop.f32.mrb[0].mxu0
    %v177 = vadd.f32 %v103, %v176
    %v178 = vpop.f32.mrb[0].mxu0
    %v179 = vadd.f32 %v107, %v178
    %180 = vmatprep.mubr.f32.mxu0 0.0
    %181 = vmatmul.mubr.f32.gmra.mrb[0].mxu0 %v63
    %v182 = vpop.f32.mrb[0].mxu0
    %v183 = vadd.f32 %v103, %v182
    %v184 = vpop.f32.mrb[0].mxu0
    %v185 = vadd.f32 %v107, %v184
    %186 = vmatprep.mubr.f32.mxu0 0.0
    %187 = vmatmul.mubr.f32.gmra.mrb[0].mxu0 %v64
    %v188 = vpop.f32.mrb[0].mxu0
    %v189 = vadd.f32 %v103, %v188
    %v190 = vpop.f32.mrb[0].mxu0
    %v191 = vadd.f32 %v107, %v190
    %192 = vmatprep.mubr.f32.mxu0 0.0
    %193 = vmatmul.mubr.f32.gmra.mrb[0].mxu0 %v65
    %v194 = vpop.f32.mrb[0].mxu0
    %v195 = vadd.f32 %v103, %v194
    %v196 = vpop.f32.mrb[0].mxu0
    %v197 = vadd.f32 %v107, %v196
    %198 = vdwg.mxu0
    %v199 = vmul.f32 %v177, 0.5
    %v200 = vmul.f32 %v179, 0.5
    %v201 = vmul.f32 %v183, 0.5
    %v202 = vmul.f32 %v185, 0.5
    %v203 = vmul.f32 %v189, 0.5
    %v204 = vmul.f32 %v191, 0.5
    %v205 = vmul.f32 %v195, 0.5
    %v206 = vmul.f32 %v197, 0.5
    %v207 = vmul.f32 %v177, 0.70710677
    %v208 = vmul.f32 %v179, 0.70710677
    %v209 = vmul.f32 %v183, 0.70710677
    %v210 = vmul.f32 %v185, 0.70710677
    %v211 = vmul.f32 %v189, 0.70710677
    %v212 = vmul.f32 %v191, 0.70710677
    %v213 = vmul.f32 %v195, 0.70710677
    %v214 = vmul.f32 %v197, 0.70710677
    %v215 = verf.f32.pop %v207
    %v216 = verf.f32.pop %v208
    %v217 = verf.f32.pop %v209
    %v218 = verf.f32.pop %v210
    %v219 = verf.f32.pop %v211
    %v220 = verf.f32.pop %v212
    %v221 = verf.f32.pop %v213
    %v222 = verf.f32.pop %v214
    %v223 = vadd.f32 %v215, 1.0
    %v224 = vadd.f32 %v216, 1.0
    %v225 = vadd.f32 %v217, 1.0
    %v226 = vadd.f32 %v218, 1.0
    %v227 = vadd.f32 %v219, 1.0
    %v228 = vadd.f32 %v220, 1.0
    %v229 = vadd.f32 %v221, 1.0
    %v230 = vadd.f32 %v222, 1.0
    %v231 = vmul.f32 %v199, %v223
    %v232 = vmul.f32 %v200, %v224
    %v233 = vmul.f32 %v201, %v225
    %v234 = vmul.f32 %v202, %v226
    %v235 = vmul.f32 %v203, %v227
    %v236 = vmul.f32 %v204, %v228
    %v237 = vmul.f32 %v205, %v229
    %v238 = vmul.f32 %v206, %v230
    %v239 = vld [vmem:[#allocation7] sm:$0xff]
    %v240 = vld [vmem:[#allocation7 + $0x8] sm:$0xff]
    %v241 = vld [vmem:[#allocation7 + $0x10] sm:$0xff]
    %v242 = vld [vmem:[#allocation7 + $0x18] sm:$0xff]
    %v243 = vld [vmem:[#allocation7 + $0x20] sm:$0xff]
    %v244 = vld [vmem:[#allocation7 + $0x28] sm:$0xff]
    %v245 = vld [vmem:[#allocation7 + $0x30] sm:$0xff]
    %v246 = vld [vmem:[#allocation7 + $0x38] sm:$0xff]
    %v247 = vld [vmem:[#allocation7 + $0x40] sm:$0xff]
    %v248 = vld [vmem:[#allocation7 + $0x48] sm:$0xff]
    %v249 = vld [vmem:[#allocation7 + $0x50] sm:$0xff]
    %v250 = vld [vmem:[#allocation7 + $0x58] sm:$0xff]
    %v251 = vld [vmem:[#allocation7 + $0x60] sm:$0xff]
    %v252 = vld [vmem:[#allocation7 + $0x68] sm:$0xff]
    %v253 = vld [vmem:[#allocation7 + $0x70] sm:$0xff]
    %v254 = vld [vmem:[#allocation7 + $0x78] sm:$0xff]
    %v255 = vld [vmem:[#allocation7 + $0x80] sm:$0xff]
    %v256 = vld [vmem:[#allocation7 + $0x88] sm:$0xff]
    %v257 = vld [vmem:[#allocation7 + $0x90] sm:$0xff]
    %v258 = vld [vmem:[#allocation7 + $0x98] sm:$0xff]
    %v259 = vld [vmem:[#allocation7 + $0xa0] sm:$0xff]
    %v260 = vld [vmem:[#allocation7 + $0xa8] sm:$0xff]
    %v261 = vld [vmem:[#allocation7 + $0xb0] sm:$0xff]
    %v262 = vld [vmem:[#allocation7 + $0xb8] sm:$0xff]
    %v263 = vld [vmem:[#allocation7 + $0xc0] sm:$0xff]
    %v264 = vld [vmem:[#allocation7 + $0xc8] sm:$0xff]
    %v265 = vld [vmem:[#allocation7 + $0xd0] sm:$0xff]
    %v266 = vld [vmem:[#allocation7 + $0xd8] sm:$0xff]
    %v267 = vld [vmem:[#allocation7 + $0xe0] sm:$0xff]
    %v268 = vld [vmem:[#allocation7 + $0xe8] sm:$0xff]
    %v269 = vld [vmem:[#allocation7 + $0xf0] sm:$0xff]
    %v270 = vld [vmem:[#allocation7 + $0xf8] sm:$0xff]
    %v271 = vld [vmem:[%s4] sm:$0x1]
    %v273 = vlaneseq
    %v274 = vshrl.u32 %v273, 7
    %v275 = vsub.s32 0, %v274
    %v276 = vrot.slane %v271, %v275
    %278 = vmatprep.subr.mxu0 0.0
    %279 = vmatpush1.msra.mxu0 %v239
    %280 = vmatprep.subr.mxu0 0.0
    %281 = vmatpush1.msra.mxu0 %v240
    %282 = vmatprep.subr.mxu0 0.0
    %283 = vmatpush1.msra.mxu0 %v241
    %284 = vmatprep.subr.mxu0 0.0
    %285 = vmatpush1.msra.mxu0 %v242
    %286 = vmatprep.subr.mxu0 0.0
    %287 = vmatpush1.msra.mxu0 %v243
    %288 = vmatprep.subr.mxu0 0.0
    %289 = vmatpush1.msra.mxu0 %v244
    %290 = vmatprep.subr.mxu0 0.0
    %291 = vmatpush1.msra.mxu0 %v245
    %292 = vmatprep.subr.mxu0 0.0
    %293 = vmatpush1.msra.mxu0 %v246
    %294 = vmatprep.subr.mxu0 0.0
    %295 = vmatpush1.msra.mxu0 %v247
    %296 = vmatprep.subr.mxu0 0.0
    %297 = vmatpush1.msra.mxu0 %v248
    %298 = vmatprep.subr.mxu0 0.0
    %299 = vmatpush1.msra.mxu0 %v249
    %300 = vmatprep.subr.mxu0 0.0
    %301 = vmatpush1.msra.mxu0 %v250
    %302 = vmatprep.subr.mxu0 0.0
    %303 = vmatpush1.msra.mxu0 %v251
    %304 = vmatprep.subr.mxu0 0.0
    %305 = vmatpush1.msra.mxu0 %v252
    %306 = vmatprep.subr.mxu0 0.0
    %307 = vmatpush1.msra.mxu0 %v253
    %308 = vmatprep.subr.mxu0 0.0
    %309 = vmatpush1.msra.mxu0 %v254
    %310 = vmatprep.subr.mxu0 0.0
    %311 = vmatpush1.msra.mxu0 %v255
    %312 = vmatprep.subr.mxu0 0.0
    %313 = vmatpush1.msra.mxu0 %v256
    %314 = vmatprep.subr.mxu0 0.0
    %315 = vmatpush1.msra.mxu0 %v257
    %316 = vmatprep.subr.mxu0 0.0
    %317 = vmatpush1.msra.mxu0 %v258
    %318 = vmatprep.subr.mxu0 0.0
    %319 = vmatpush1.msra.mxu0 %v259
    %320 = vmatprep.subr.mxu0 0.0
    %321 = vmatpush1.msra.mxu0 %v260
    %322 = vmatprep.subr.mxu0 0.0
    %323 = vmatpush1.msra.mxu0 %v261
    %324 = vmatprep.subr.mxu0 0.0
    %325 = vmatpush1.msra.mxu0 %v262
    %326 = vmatprep.subr.mxu0 0.0
    %327 = vmatpush1.msra.mxu0 %v263
    %328 = vmatprep.subr.mxu0 0.0
    %329 = vmatpush1.msra.mxu0 %v264
    %330 = vmatprep.subr.mxu0 0.0
    %331 = vmatpush1.msra.mxu0 %v265
    %332 = vmatprep.subr.mxu0 0.0
    %333 = vmatpush1.msra.mxu0 %v266
    %334 = vmatprep.subr.mxu0 0.0
    %335 = vmatpush1.msra.mxu0 %v267
    %336 = vmatprep.subr.mxu0 0.0
    %337 = vmatpush1.msra.mxu0 %v268
    %338 = vmatprep.subr.mxu0 0.0
    %339 = vmatpush1.msra.mxu0 %v269
    %340 = vmatprep.subr.mxu0 0.0
    %341 = vmatpush1.msra.mxu0 %v270
    %342 = vmatprep.mubr.f32.mxu0 %v232
    %343 = vmatmul.mubr.f32.gmra.mrb[0].mxu0 %v231
    %v344 = vpop.f32.mrb[0].mxu0
    %v345 = vadd.f32 %v276, %v344
    %v346 = vpop.f32.mrb[0].mxu0
    %347 = vmatprep.mubr.f32.mxu0 %v234
    %348 = vmatmul.mubr.f32.gmra.mrb[0].mxu0 %v233
    %v349 = vpop.f32.mrb[0].mxu0
    %v350 = vadd.f32 %v276, %v349
    %v351 = vpop.f32.mrb[0].mxu0
    %352 = vmatprep.mubr.f32.mxu0 %v236
    %353 = vmatmul.mubr.f32.gmra.mrb[0].mxu0 %v235
    %v354 = vpop.f32.mrb[0].mxu0
    %v355 = vadd.f32 %v276, %v354
    %v356 = vpop.f32.mrb[0].mxu0
    %357 = vmatprep.mubr.f32.mxu0 %v238
    %358 = vmatmul.mubr.f32.gmra.mrb[0].mxu0 %v237
    %v359 = vpop.f32.mrb[0].mxu0
    %v360 = vadd.f32 %v276, %v359
    %v361 = vpop.f32.mrb[0].mxu0
    %362 = vdwg.mxu0
    %363 = vst [vmem:[#allocation8] sm:$0xff] %v345
    %364 = vst [vmem:[#allocation8 + $0x8] sm:$0xff] %v350
    %365 = vst [vmem:[#allocation8 + $0x10] sm:$0xff] %v355
    %366 = vst [vmem:[#allocation8 + $0x18] sm:$0xff] %v360
    // Predicated region
    $region34: #{tpu_custom_call.1} parent=1 // pred_check
      _
    $region35: #{tpu_custom_call.1} parent=1 // pred_check_branch
      %368 = sbr.rel (0) target = $region37
    $region36: #{tpu_custom_call.1} parent=1 // pred_region
      %s370 = ssub.s32 512, 512
      %371 = vsyncadd [#allocation4], %s370
      %s372 = sshll.u32 [#allocation8], 4
      %s373 = int_to_ptr.vmem [resolvable:$true] %s372
      %378 = dma.vmem_to_hbm [thread:$0]  %s373, 512, %s5, [#allocation4], 128, 128, 8
    $region37: #{tpu_custom_call.1} parent=1 // pred_fallthru
      _
    // Predicated region
    $region38: #{tpu_custom_call.1} parent=1 // pred_check
      _
    $region39: #{tpu_custom_call.1} parent=1 // pred_check_branch
      %380 = sbr.rel (0) target = $region41
    $region40: #{tpu_custom_call.1} parent=1 // pred_region
      %381 = dma.done [#allocation4], 512
    $region41: #{tpu_custom_call.1} parent=1 // pred_fallthru
      _
    %382 = vsyncpa [#allocation3], 1
    %383 = vsyncpa [#allocation6], 1
    %384 = vsyncpa [#allocation4], 1

</llo_original>
